<compile_context>
chip_gen: v5e
topology: v5e:2x2
jax: 0.10.0
libtpu: 0.0.40
codegen_flags: <defaults>
</compile_context>

<pallas_src>
from functools import partial

import jax
import jax.numpy as jnp
from jax.experimental import pallas as pl
from jax.experimental.pallas import tpu as pltpu


def mnet_kernel(x_ref, w_ref, b_ref, o_ref, *, num_filters, t_pairs):
    # x_ref : (1, C*T, HW) block for batch n
    # w_ref : (Tp*F, C*T) unrolled conv weight (constant across grid -> DMA'd once)
    # b_ref : (F, 1)
    # o_ref : (1, F, HW)
    big = jnp.dot(w_ref[...], x_ref[0],
                  preferred_element_type=jnp.float32)        # (Tp*F, HW): all conv frames
    # Temporal max-pool over the Tp chunks (static, unrolled at trace time).
    result = big[0:num_filters, :]
    for p in range(1, t_pairs):
        result = jnp.maximum(result, big[p * num_filters:(p + 1) * num_filters, :])
    # Deferred bias add (max_t(x + b) == max_t(x) + b).
    o_ref[0] = (result + b_ref[...]).astype(o_ref.dtype)


def mnet_forward(chirp_maps, weight, bias):
    """chirp_maps: (N, C_in, T, H, W), weight: (F, C_in, 2, 1, 1), bias: (F,)."""
    N, C, T, H, W = chirp_maps.shape
    F = weight.shape[0]
    Tp = T // 2
    T_even = 2 * Tp
    HW = H * W

    # PyTorch's stride-2 conv silently drops a trailing odd frame; mirror that (no-op if T even).
    x_in = chirp_maps[:, :, :T_even]
    # Contiguous-dim merges only: no transpose, no extra HBM round trip.
    x = x_in.reshape(N, C * T_even, HW)

    # Build the tiny unrolled conv weight (Tp*F, C*T): one matmul produces all Tp conv frames.
    w2 = weight.reshape(F, C, 2).astype(jnp.float32)
    tprime = jnp.arange(Tp)[:, None, None]                    # (Tp, 1, 1)
    tt = jnp.arange(T_even)[None, :, None]                    # (1, T, 1)
    kk = jnp.arange(2)[None, None, :]                         # (1, 1, 2)
    sel = (tt == 2 * tprime + kk).astype(jnp.float32)         # (Tp, T, 2)
    w_big = jnp.einsum('fck,ptk->pfct', w2, sel).reshape(Tp * F, C * T_even)
    b_col = bias.reshape(F, 1).astype(jnp.float32)

    out = pl.pallas_call(
        partial(mnet_kernel, num_filters=F, t_pairs=Tp),
        out_shape=jax.ShapeDtypeStruct((N, F, HW), jnp.float32),
        grid_spec=pltpu.PrefetchScalarGridSpec(
            num_scalar_prefetch=0,
            grid=(N,),
            in_specs=[
                pl.BlockSpec((1, C * T_even, HW), lambda n: (n, 0, 0)),
                pl.BlockSpec((Tp * F, C * T_even), lambda n: (0, 0)),
                pl.BlockSpec((F, 1), lambda n: (0, 0)),
            ],
            out_specs=pl.BlockSpec((1, F, HW), lambda n: (n, 0, 0)),
        ),
        compiler_params=pltpu.CompilerParams(
            dimension_semantics=("parallel",)),
    )(x, w_big, b_col)

    # Back to PyTorch-style NCTHW: (N, F, 1, H, W).
    return out.reshape(N, F, 1, H, W)


def mnet_reference(chirp_maps, weight, bias):
    """Pure-JAX reference of the PyTorch forward (for a correctness check)."""
    N, C, T, H, W = chirp_maps.shape
    F = weight.shape[0]
    Tp = T // 2
    x = chirp_maps[:, :, :2 * Tp].reshape(N, C, Tp, 2, H, W)
    w = weight.reshape(F, C, 2)
    conv = jnp.einsum('nctkhw,fck->nfthw', x, w) + bias[None, :, None, None, None]
    return jnp.max(conv, axis=2, keepdims=True)


if __name__ == "__main__":
    # numFrames = 8, numFilters = 32, useVelocity = False -> C_in = 2
    num_frames, num_filters, c_in = 8, 32, 2
    N, H, W = 2, 16, 16

    key = jax.random.PRNGKey(0)
    kx, kw, kb = jax.random.split(key, 3)
    chirp_maps = jax.random.normal(kx, (N, c_in, num_frames, H, W), jnp.float32)
    weight = jax.random.normal(kw, (num_filters, c_in, 2, 1, 1), jnp.float32) * 0.1
    bias = jax.random.normal(kb, (num_filters,), jnp.float32) * 0.1

    out = mnet_forward(chirp_maps, weight, bias)
    out = jax.block_until_ready(out)

    ref = mnet_reference(chirp_maps, weight, bias)
    assert out.shape == (N, num_filters, 1, H, W), out.shape
    assert jnp.allclose(out, ref, atol=1e-5, rtol=1e-5), "mismatch vs reference"
    print("KERNEL_OK")
</pallas_src>

<mosaic_0001>
module attributes {stable_mosaic.version = 11 : i64} {
  func.func @mnet_kernel(%arg0: i32, %arg1: memref<1x16x256xf32, #tpu.memory_space<vmem>>, %arg2: memref<128x16xf32, #tpu.memory_space<vmem>>, %arg3: memref<32x1xf32, #tpu.memory_space<vmem>>, %arg4: memref<1x32x256xf32, #tpu.memory_space<vmem>>) attributes {dimension_semantics = [#tpu.dimension_semantics<parallel>], iteration_bounds = array<i64: 2>, scalar_prefetch = 0 : i64, scratch_operands = 0 : i64, tpu.core_type = #tpu.core_type<tc>, window_params = [{transform_indices = @transform_0, window_bounds = array<i64: 1, 16, 256>}, {pipeline_mode = #tpu.pipeline_mode<synchronous>, transform_indices = @transform_1, window_bounds = array<i64: 128, 16>}, {pipeline_mode = #tpu.pipeline_mode<synchronous>, transform_indices = @transform_2, window_bounds = array<i64: 32, 1>}, {transform_indices = @transform_3, window_bounds = array<i64: 1, 32, 256>}]} {
    %c0 = arith.constant 0 : index
    %c0_0 = arith.constant 0 : index
    %0 = vector.load %arg2[%c0, %c0_0] : memref<128x16xf32, #tpu.memory_space<vmem>>, vector<128x16xf32>
    %c0_1 = arith.constant 0 : index
    %c0_2 = arith.constant 0 : index
    %c0_3 = arith.constant 0 : index
    %1 = vector.load %arg1[%c0_1, %c0_2, %c0_3] : memref<1x16x256xf32, #tpu.memory_space<vmem>>, vector<1x16x256xf32>
    %2 = vector.shape_cast %1 : vector<1x16x256xf32> to vector<16x256xf32>
    %cst = arith.constant dense<0.000000e+00> : vector<128x256xf32>
    %3 = tpu.matmul %0, %2, %cst {dimension_numbers = #tpu.dot_dimension_numbers<[1], [0], [0], [1], [0, 0, 1, 1], [], []>} : vector<128x16xf32>, vector<16x256xf32>, vector<128x256xf32> -> vector<128x256xf32>
    %4 = vector.extract_strided_slice %3 {offsets = [0, 0], sizes = [32, 256], strides = [1, 1]} : vector<128x256xf32> to vector<32x256xf32>
    %5 = vector.extract_strided_slice %3 {offsets = [32, 0], sizes = [32, 256], strides = [1, 1]} : vector<128x256xf32> to vector<32x256xf32>
    %6 = arith.maximumf %4, %5 : vector<32x256xf32>
    %7 = vector.extract_strided_slice %3 {offsets = [64, 0], sizes = [32, 256], strides = [1, 1]} : vector<128x256xf32> to vector<32x256xf32>
    %8 = arith.maximumf %6, %7 : vector<32x256xf32>
    %9 = vector.extract_strided_slice %3 {offsets = [96, 0], sizes = [32, 256], strides = [1, 1]} : vector<128x256xf32> to vector<32x256xf32>
    %10 = arith.maximumf %8, %9 : vector<32x256xf32>
    %c0_4 = arith.constant 0 : index
    %c0_5 = arith.constant 0 : index
    %11 = vector.load %arg3[%c0_4, %c0_5] : memref<32x1xf32, #tpu.memory_space<vmem>>, vector<32x1xf32>
    %12 = vector.broadcast %11 : vector<32x1xf32> to vector<32x256xf32>
    %13 = arith.addf %10, %12 : vector<32x256xf32>
    %c0_6 = arith.constant 0 : index
    %c0_7 = arith.constant 0 : index
    %c0_8 = arith.constant 0 : index
    %14 = vector.load %arg4[%c0_6, %c0_7, %c0_8] : memref<1x32x256xf32, #tpu.memory_space<vmem>>, vector<1x32x256xf32>
    %15 = vector.shape_cast %14 : vector<1x32x256xf32> to vector<32x256xf32>
    %16 = vector.shape_cast %13 : vector<32x256xf32> to vector<1x32x256xf32>
    tpu.vector_store %arg4[%c0_6, %c0_7, %c0_8], %16 {strides = array<i32>} : memref<1x32x256xf32, #tpu.memory_space<vmem>>, vector<1x32x256xf32>,
    return
  }
  func.func @transform_0(%arg0: i32) -> (i32, i32, i32) {
    %c0_i32 = arith.constant 0 : i32
    %c0_i32_0 = arith.constant 0 : i32
    %c0_i32_1 = arith.constant 0 : i32
    return %arg0, %c0_i32, %c0_i32_0 : i32, i32, i32
  }
  func.func @transform_1(%arg0: i32) -> (i32, i32) {
    %c0_i32 = arith.constant 0 : i32
    %c0_i32_0 = arith.constant 0 : i32
    %c0_i32_1 = arith.constant 0 : i32
    return %c0_i32, %c0_i32_0 : i32, i32
  }
  func.func @transform_2(%arg0: i32) -> (i32, i32) {
    %c0_i32 = arith.constant 0 : i32
    %c0_i32_0 = arith.constant 0 : i32
    %c0_i32_1 = arith.constant 0 : i32
    return %c0_i32, %c0_i32_0 : i32, i32
  }
  func.func @transform_3(%arg0: i32) -> (i32, i32, i32) {
    %c0_i32 = arith.constant 0 : i32
    %c0_i32_0 = arith.constant 0 : i32
    %c0_i32_1 = arith.constant 0 : i32
    return %arg0, %c0_i32, %c0_i32_0 : i32, i32, i32
  }
}

</mosaic_0001>

<llo_original>
// kernel: tpu_custom_call.1
$region0: #{tpu_custom_call.1}
  #allocation0 [shape = 'u32[]', space=smem, size = 0x4, offset = 0x4, fixed_abs, tag = 'smem constant byte address 0x4 - core index']
  #allocation1 [shape = 'u32[72,128]{1,0:T(1,128)}', space=vmem, size = 0x9000, scoped, tag = 'internal scratch']
  %s0 = inlined_call_operand.vmem [shape: f32[2,16,256], index: 0, kind: input, shape index: {}]
  %s1 = inlined_call_operand.vmem [shape: f32[128,16], index: 1, kind: input, shape index: {}]
  %s2 = inlined_call_operand.vmem [shape: f32[32,1], index: 2, kind: input, shape index: {}]
  %s3 = inlined_call_operand.hbm [shape: f32[2,32,256], index: 3, kind: output, shape index: {}]
  %s4 = sld [smem:[#allocation0]]
  $region45: #{tpu_custom_call.1} parent=0
    _
  %s6 = ssub.s32 1, %s4
  %s7 = scalar_select 0, %s6, %s4
  $region1: #{tpu_custom_call.1} parent=0
    #allocation2 [shape = 'u8[65536]{0}', space=vmem, size = 0x10000, scoped, tag = 'output window, operand 0']
    #allocation3 [shape = 's32[2]{0}', space=sflag, size = 0x8, scoped, tag = 'scoped memory for tpu_custom_call.1']
    %8 = vsyncpa [#allocation3], 0
    %s9 = scalar_lea.sflag [#allocation3], 1
    %10 = vsyncpa %s9, 0
    loop: start=0, step=1, limit=4
    $region2: #{tpu_custom_call.1} parent=1 // loop_pre_header
      _
    $region3: #{tpu_custom_call.1} parent=1 // loop_header
      %s12 = sphi 0, %s16
      %p13 = scmp.ge.s32.totalorder %s12, 4
      %s22 = sphi 0, %s24
      %s25 = sphi 0, %s22
      %s26 = sphi 0, %s25
      %s42 = sphi 0, %s26
      %s46 = sphi 0, %s46
      %s48 = sphi 0, %s46
      %s49 = sphi 0, %s48
      %s63 = sphi 0, %s49
      %s67 = sphi 0, %s67
      %s69 = sphi 0, %s67
      %s70 = sphi 0, %s69
      %s84 = sphi 0, %s70
      %s90 = sphi 0, %s92
      %s93 = sphi 0, %s90
      %s94 = sphi 0, %s93
      %s110 = sphi 0, %s94
    $region4: #{tpu_custom_call.1} parent=1 // loop_header_branch
      %15 = sbr.rel (%p13) target = $region8
    $region5: #{tpu_custom_call.1} parent=1 // loop_body
      %s17 = ssub.s32 %s12, 1
      %s18 = ssub.s32 %s12, 2
      %s19 = sadd.s32 %s12, 1
      %s20 = ssub.s32 %s12, %s19
      %p21 = scmp.eq.s32.totalorder %s20, 0
      %s23 = sadd.s32 %s22, 1
      %s24 = scalar_select %p21, %s22, %s23
      %p27 = pneg %p21
      %p28 = scmp.eq.s32.totalorder %s12, 1
      %p29 = por %p27, %p28
      %p30 = scmp.ne.s32.totalorder %s22, %s25
      %p31 = scmp.eq.s32.totalorder %s12, 0
      %p32 = por %p30, %p31
      %p33 = scmp.ne.s32.totalorder %s22, %s25
      %p34 = scmp.eq.s32.totalorder %s17, 1
      %p35 = por %p33, %p34
      %p36 = scmp.ne.s32.totalorder %s25, %s26
      %p37 = scmp.eq.s32.totalorder %s17, 0
      %p38 = por %p36, %p37
      %p39 = scmp.ne.s32.totalorder %s25, %s26
      %p40 = scmp.eq.s32.totalorder %s18, 1
      %p41 = por %p39, %p40
      %p43 = scmp.ne.s32.totalorder %s26, %s42
      %p44 = scmp.eq.s32.totalorder %s18, 0
      %p45 = por %p43, %p44
      %s47 = sadd.s32 %s46, 1
      %p50 = scmp.eq.s32.totalorder %s12, 1
      %p51 = scmp.ne.s32.totalorder %s46, %s48
      %p52 = scmp.eq.s32.totalorder %s12, 0
      %p53 = por %p51, %p52
      %p54 = scmp.ne.s32.totalorder %s46, %s48
      %p55 = scmp.eq.s32.totalorder %s17, 1
      %p56 = por %p54, %p55
      %p57 = scmp.ne.s32.totalorder %s48, %s49
      %p58 = scmp.eq.s32.totalorder %s17, 0
      %p59 = por %p57, %p58
      %p60 = scmp.ne.s32.totalorder %s48, %s49
      %p61 = scmp.eq.s32.totalorder %s18, 1
      %p62 = por %p60, %p61
      %p64 = scmp.ne.s32.totalorder %s49, %s63
      %p65 = scmp.eq.s32.totalorder %s18, 0
      %p66 = por %p64, %p65
      %s68 = sadd.s32 %s67, 1
      %p71 = scmp.eq.s32.totalorder %s12, 1
      %p72 = scmp.ne.s32.totalorder %s67, %s69
      %p73 = scmp.eq.s32.totalorder %s12, 0
      %p74 = por %p72, %p73
      %p75 = scmp.ne.s32.totalorder %s67, %s69
      %p76 = scmp.eq.s32.totalorder %s17, 1
      %p77 = por %p75, %p76
      %p78 = scmp.ne.s32.totalorder %s69, %s70
      %p79 = scmp.eq.s32.totalorder %s17, 0
      %p80 = por %p78, %p79
      %p81 = scmp.ne.s32.totalorder %s69, %s70
      %p82 = scmp.eq.s32.totalorder %s18, 1
      %p83 = por %p81, %p82
      %p85 = scmp.ne.s32.totalorder %s70, %s84
      %p86 = scmp.eq.s32.totalorder %s18, 0
      %p87 = por %p85, %p86
      %s88 = ssub.s32 %s12, %s19
      %p89 = scmp.eq.s32.totalorder %s88, 0
      %s91 = sadd.s32 %s90, 1
      %s92 = scalar_select %p89, %s90, %s91
      %p95 = pneg %p89
      %p96 = scmp.eq.s32.totalorder %s12, 1
      %p97 = por %p95, %p96
      %p98 = scmp.ne.s32.totalorder %s90, %s93
      %p99 = scmp.eq.s32.totalorder %s12, 0
      %p100 = por %p98, %p99
      %p101 = scmp.ne.s32.totalorder %s90, %s93
      %p102 = scmp.eq.s32.totalorder %s17, 1
      %p103 = por %p101, %p102
      %p104 = scmp.ne.s32.totalorder %s93, %s94
      %p105 = scmp.eq.s32.totalorder %s17, 0
      %p106 = por %p104, %p105
      %p107 = scmp.ne.s32.totalorder %s93, %s94
      %p108 = scmp.eq.s32.totalorder %s18, 1
      %p109 = por %p107, %p108
      %p111 = scmp.ne.s32.totalorder %s94, %s110
      %p112 = scmp.eq.s32.totalorder %s18, 0
      %p113 = por %p111, %p112
      %p114 = scmp.le.s32.totalorder 1, %s12
      %p115 = scmp.lt.s32.totalorder %s12, 3
      %p116 = pnand %p114, %p115
      %p117 = pneg %p116
      // Predicated region
      $region9: #{tpu_custom_call.1} parent=5 // pred_check
        _
      $region10: #{tpu_custom_call.1} parent=5 // pred_check_branch
        %119 = sbr.rel (%p116) target = $region12
      $region11: #{tpu_custom_call.1} parent=5 // pred_region
        %s120 = ssub.s32 %s12, 1
        // Predicated region
        $region13: #{tpu_custom_call.1} parent=11 // pred_check
          %p121 = pneg %p59
        $region14: #{tpu_custom_call.1} parent=11 // pred_check_branch
          %123 = sbr.rel (%p121) target = $region16
        $region15: #{tpu_custom_call.1} parent=11 // pred_region
          _
        $region16: #{tpu_custom_call.1} parent=11 // pred_fallthru
          _
        // Predicated region
        $region17: #{tpu_custom_call.1} parent=11 // pred_check
          %p124 = pneg %p80
        $region18: #{tpu_custom_call.1} parent=11 // pred_check_branch
          %126 = sbr.rel (%p124) target = $region20
        $region19: #{tpu_custom_call.1} parent=11 // pred_region
          _
        $region20: #{tpu_custom_call.1} parent=11 // pred_fallthru
          _
      $region12: #{tpu_custom_call.1} parent=5 // pred_fallthru
        _
      %p127 = scmp.lt.s32.totalorder %s12, 2
      // Predicated region
      $region21: #{tpu_custom_call.1} parent=5 // pred_check
        %p128 = pneg %p127
      $region22: #{tpu_custom_call.1} parent=5 // pred_check_branch
        %130 = sbr.rel (%p128) target = $region24
      $region23: #{tpu_custom_call.1} parent=5 // pred_region
        // Predicated region
        $region25: #{tpu_custom_call.1} parent=23 // pred_check
          %p131 = pneg %p32
        $region26: #{tpu_custom_call.1} parent=23 // pred_check_branch
          %133 = sbr.rel (%p131) target = $region28
        $region27: #{tpu_custom_call.1} parent=23 // pred_region
          %p134 = scmp.lt.s32.totalorder %s12, 1
          %s135 = scalar_select %p134, %s12, 1
          %s136 = smul.addr %s135, 4
          %s137 = smul.addr %s136, 8
          %s138 = scalar_lea.vmem %s0, %s137
        $region28: #{tpu_custom_call.1} parent=23 // pred_fallthru
          _
      $region24: #{tpu_custom_call.1} parent=5 // pred_fallthru
        _
      %p139 = scmp.le.s32.totalorder 1, %s12
      %p140 = scmp.lt.s32.totalorder %s12, 3
      %p141 = pnand %p139, %p140
      %p142 = pneg %p141
      // Predicated region
      $region29: #{tpu_custom_call.1} parent=5 // pred_check
        _
      $region30: #{tpu_custom_call.1} parent=5 // pred_check_branch
        %144 = sbr.rel (%p141) target = $region32
      $region31: #{tpu_custom_call.1} parent=5 // pred_region
        %s145 = ssub.s32 %s12, 1
        %p146 = scmp.lt.s32.totalorder %s17, 1
        %s147 = scalar_select %p146, %s17, 1
        %s148 = smul.addr %s147, 4
        %s149 = smul.addr %s148, 8
        %s150 = scalar_lea.vmem %s0, %s149
        %p151 = pneg %p38
        %p152 = pneg %p35
        %p153 = pneg %p59
        %p154 = pneg %p56
        %p155 = pneg %p80
        %p156 = pneg %p77
        %p157 = pneg %p106
        %p158 = pneg %p103
        %s159 = sand.u32 %s93, 1
        %s160 = scalar_lea.sflag [#allocation3], %s159
        %s161 = sand.u32 %s93, 1
        %s162 = smul.addr %s161, 64
        %s163 = scalar_lea.vmem [#allocation2], %s162
        %p164 = scmp.lt.s32.totalorder %s17, 1
        %s165 = scalar_select %p164, %s17, 1
        %s166 = smul.addr %s165, 4
        %s167 = smul.addr %s166, 8
        %s168 = scalar_lea.vmem %s0, %s167
        %v169 = vld [vmem:[%s1] sm:$0xff]
        %v170 = vld [vmem:[%s1 + $0x8] sm:$0xff]
        %v171 = vld [vmem:[%s1 + $0x10] sm:$0xff]
        %v172 = vld [vmem:[%s1 + $0x18] sm:$0xff]
        %v173 = vld [vmem:[%s1 + $0x20] sm:$0xff]
        %v174 = vld [vmem:[%s1 + $0x28] sm:$0xff]
        %v175 = vld [vmem:[%s1 + $0x30] sm:$0xff]
        %v176 = vld [vmem:[%s1 + $0x38] sm:$0xff]
        %v177 = vld [vmem:[%s1 + $0x40] sm:$0xff]
        %v178 = vld [vmem:[%s1 + $0x48] sm:$0xff]
        %v179 = vld [vmem:[%s1 + $0x50] sm:$0xff]
        %v180 = vld [vmem:[%s1 + $0x58] sm:$0xff]
        %v181 = vld [vmem:[%s1 + $0x60] sm:$0xff]
        %v182 = vld [vmem:[%s1 + $0x68] sm:$0xff]
        %v183 = vld [vmem:[%s1 + $0x70] sm:$0xff]
        %v184 = vld [vmem:[%s1 + $0x78] sm:$0xff]
        %v185 = vld [vmem:[%s168] sm:$0xff]
        %v186 = vld [vmem:[%s168 + $0x8] sm:$0xff]
        %v187 = vld [vmem:[%s168 + $0x10] sm:$0xff]
        %v188 = vld [vmem:[%s168 + $0x18] sm:$0xff]
        %vm189 = vcmask 130048
        %v191 = vsel %vm189, %v169, 0
        %v194 = vsel %vm189, %v170, 0
        %v197 = vsel %vm189, %v171, 0
        %v200 = vsel %vm189, %v172, 0
        %v203 = vsel %vm189, %v173, 0
        %v206 = vsel %vm189, %v174, 0
        %v209 = vsel %vm189, %v175, 0
        %v212 = vsel %vm189, %v176, 0
        %v215 = vsel %vm189, %v177, 0
        %v218 = vsel %vm189, %v178, 0
        %v221 = vsel %vm189, %v179, 0
        %v224 = vsel %vm189, %v180, 0
        %v227 = vsel %vm189, %v181, 0
        %v230 = vsel %vm189, %v182, 0
        %v233 = vsel %vm189, %v183, 0
        %v236 = vsel %vm189, %v184, 0
        %238 = vmatpush.msra.mxu0 0.0
        %239 = vmatpush.msra.mxu0 0.0
        %240 = vmatpush.msra.mxu0 0.0
        %241 = vmatpush.msra.mxu0 0.0
        %242 = vmatpush.msra.mxu0 0.0
        %243 = vmatpush.msra.mxu0 0.0
        %244 = vmatpush.msra.mxu0 0.0
        %245 = vmatpush.msra.mxu0 0.0
        %246 = vmatpush.msra.mxu0 0.0
        %247 = vmatpush.msra.mxu0 0.0
        %248 = vmatpush.msra.mxu0 0.0
        %249 = vmatpush.msra.mxu0 0.0
        %250 = vmatpush.msra.mxu0 0.0
        %251 = vmatpush.msra.mxu0 0.0
        %252 = vmatpush.msra.mxu0 %v187
        %253 = vmatpush.msra.mxu0 %v185
        %254 = vmatmul.f32.gmra.mxu0 %v191
        %v255 = vpop.f32.mrf.mxu0
        %v256 = vadd.f32 0.0, %v255
        %257 = vmatmul.f32.gmra.mxu0 %v194
        %v258 = vpop.f32.mrf.mxu0
        %v259 = vadd.f32 0.0, %v258
        %260 = vmatmul.f32.gmra.mxu0 %v197
        %v261 = vpop.f32.mrf.mxu0
        %v262 = vadd.f32 0.0, %v261
        %263 = vmatmul.f32.gmra.mxu0 %v200
        %v264 = vpop.f32.mrf.mxu0
        %v265 = vadd.f32 0.0, %v264
        %266 = vmatmul.f32.gmra.mxu0 %v203
        %v267 = vpop.f32.mrf.mxu0
        %v268 = vadd.f32 0.0, %v267
        %269 = vmatmul.f32.gmra.mxu0 %v206
        %v270 = vpop.f32.mrf.mxu0
        %v271 = vadd.f32 0.0, %v270
        %272 = vmatmul.f32.gmra.mxu0 %v209
        %v273 = vpop.f32.mrf.mxu0
        %v274 = vadd.f32 0.0, %v273
        %275 = vmatmul.f32.gmra.mxu0 %v212
        %v276 = vpop.f32.mrf.mxu0
        %v277 = vadd.f32 0.0, %v276
        %278 = vmatmul.f32.gmra.mxu0 %v215
        %v279 = vpop.f32.mrf.mxu0
        %v280 = vadd.f32 0.0, %v279
        %281 = vmatmul.f32.gmra.mxu0 %v218
        %v282 = vpop.f32.mrf.mxu0
        %v283 = vadd.f32 0.0, %v282
        %284 = vmatmul.f32.gmra.mxu0 %v221
        %v285 = vpop.f32.mrf.mxu0
        %v286 = vadd.f32 0.0, %v285
        %287 = vmatmul.f32.gmra.mxu0 %v224
        %v288 = vpop.f32.mrf.mxu0
        %v289 = vadd.f32 0.0, %v288
        %290 = vmatmul.f32.gmra.mxu0 %v227
        %v291 = vpop.f32.mrf.mxu0
        %v292 = vadd.f32 0.0, %v291
        %293 = vmatmul.f32.gmra.mxu0 %v230
        %v294 = vpop.f32.mrf.mxu0
        %v295 = vadd.f32 0.0, %v294
        %296 = vmatmul.f32.gmra.mxu0 %v233
        %v297 = vpop.f32.mrf.mxu0
        %v298 = vadd.f32 0.0, %v297
        %299 = vmatmul.f32.gmra.mxu0 %v236
        %v300 = vpop.f32.mrf.mxu0
        %v301 = vadd.f32 0.0, %v300
        %302 = vdwg.mxu0
        %303 = vmatpush.msra.mxu0 0.0
        %304 = vmatpush.msra.mxu0 0.0
        %305 = vmatpush.msra.mxu0 0.0
        %306 = vmatpush.msra.mxu0 0.0
        %307 = vmatpush.msra.mxu0 0.0
        %308 = vmatpush.msra.mxu0 0.0
        %309 = vmatpush.msra.mxu0 0.0
        %310 = vmatpush.msra.mxu0 0.0
        %311 = vmatpush.msra.mxu0 0.0
        %312 = vmatpush.msra.mxu0 0.0
        %313 = vmatpush.msra.mxu0 0.0
        %314 = vmatpush.msra.mxu0 0.0
        %315 = vmatpush.msra.mxu0 0.0
        %316 = vmatpush.msra.mxu0 0.0
        %317 = vmatpush.msra.mxu0 %v188
        %318 = vmatpush.msra.mxu0 %v186
        %319 = vmatmul.f32.gmra.mxu0 %v191
        %v320 = vpop.f32.mrf.mxu0
        %v321 = vadd.f32 0.0, %v320
        %322 = vmatmul.f32.gmra.mxu0 %v194
        %v323 = vpop.f32.mrf.mxu0
        %v324 = vadd.f32 0.0, %v323
        %325 = vmatmul.f32.gmra.mxu0 %v197
        %v326 = vpop.f32.mrf.mxu0
        %v327 = vadd.f32 0.0, %v326
        %328 = vmatmul.f32.gmra.mxu0 %v200
        %v329 = vpop.f32.mrf.mxu0
        %v330 = vadd.f32 0.0, %v329
        %331 = vmatmul.f32.gmra.mxu0 %v203
        %v332 = vpop.f32.mrf.mxu0
        %v333 = vadd.f32 0.0, %v332
        %334 = vmatmul.f32.gmra.mxu0 %v206
        %v335 = vpop.f32.mrf.mxu0
        %v336 = vadd.f32 0.0, %v335
        %337 = vmatmul.f32.gmra.mxu0 %v209
        %v338 = vpop.f32.mrf.mxu0
        %v339 = vadd.f32 0.0, %v338
        %340 = vmatmul.f32.gmra.mxu0 %v212
        %v341 = vpop.f32.mrf.mxu0
        %v342 = vadd.f32 0.0, %v341
        %343 = vmatmul.f32.gmra.mxu0 %v215
        %v344 = vpop.f32.mrf.mxu0
        %v345 = vadd.f32 0.0, %v344
        %346 = vmatmul.f32.gmra.mxu0 %v218
        %v347 = vpop.f32.mrf.mxu0
        %v348 = vadd.f32 0.0, %v347
        %349 = vmatmul.f32.gmra.mxu0 %v221
        %v350 = vpop.f32.mrf.mxu0
        %v351 = vadd.f32 0.0, %v350
        %352 = vmatmul.f32.gmra.mxu0 %v224
        %v353 = vpop.f32.mrf.mxu0
        %v354 = vadd.f32 0.0, %v353
        %355 = vmatmul.f32.gmra.mxu0 %v227
        %v356 = vpop.f32.mrf.mxu0
        %v357 = vadd.f32 0.0, %v356
        %358 = vmatmul.f32.gmra.mxu0 %v230
        %v359 = vpop.f32.mrf.mxu0
        %v360 = vadd.f32 0.0, %v359
        %361 = vmatmul.f32.gmra.mxu0 %v233
        %v362 = vpop.f32.mrf.mxu0
        %v363 = vadd.f32 0.0, %v362
        %364 = vmatmul.f32.gmra.mxu0 %v236
        %v365 = vpop.f32.mrf.mxu0
        %v366 = vadd.f32 0.0, %v365
        %367 = vdwg.mxu0
        %v368 = vmax.f32 %v256, %v268
        %v369 = vmax.f32 %v321, %v333
        %v370 = vmax.f32 %v259, %v271
        %v371 = vmax.f32 %v324, %v336
        %v372 = vmax.f32 %v262, %v274
        %v373 = vmax.f32 %v327, %v339
        %v374 = vmax.f32 %v265, %v277
        %v375 = vmax.f32 %v330, %v342
        %v376 = vmax.f32 %v368, %v280
        %v377 = vmax.f32 %v369, %v345
        %v378 = vmax.f32 %v370, %v283
        %v379 = vmax.f32 %v371, %v348
        %v380 = vmax.f32 %v372, %v286
        %v381 = vmax.f32 %v373, %v351
        %v382 = vmax.f32 %v374, %v289
        %v383 = vmax.f32 %v375, %v354
        %v384 = vmax.f32 %v376, %v292
        %v385 = vmax.f32 %v377, %v357
        %v386 = vmax.f32 %v378, %v295
        %v387 = vmax.f32 %v379, %v360
        %v388 = vmax.f32 %v380, %v298
        %v389 = vmax.f32 %v381, %v363
        %v390 = vmax.f32 %v382, %v301
        %v391 = vmax.f32 %v383, %v366
        %v392 = vld [vmem:[%s2] sm:$0xff]
        %v393 = vld [vmem:[%s2 + $0x8] sm:$0xff]
        %v394 = vld [vmem:[%s2 + $0x10] sm:$0xff]
        %v395 = vld [vmem:[%s2 + $0x18] sm:$0xff]
        %397 = vset.pattern.permute.xlu0 0
        %398 = vperm.xlu0 %397, %v392
        %v399 = vpop.permute.xlu0 %398
        %402 = vset.pattern.permute.xlu0 0
        %403 = vperm.xlu0 %402, %v393
        %v404 = vpop.permute.xlu0 %403
        %407 = vset.pattern.permute.xlu0 0
        %408 = vperm.xlu0 %407, %v394
        %v409 = vpop.permute.xlu0 %408
        %412 = vset.pattern.permute.xlu0 0
        %413 = vperm.xlu0 %412, %v395
        %v414 = vpop.permute.xlu0 %413
        %v416 = vadd.f32 %v384, %v399
        %v417 = vadd.f32 %v385, %v399
        %v418 = vadd.f32 %v386, %v404
        %v419 = vadd.f32 %v387, %v404
        %v420 = vadd.f32 %v388, %v409
        %v421 = vadd.f32 %v389, %v409
        %v422 = vadd.f32 %v390, %v414
        %v423 = vadd.f32 %v391, %v414
        %424 = vst [vmem:[%s163] sm:$0xff] %v416
        %425 = vst [vmem:[%s163 + $0x8] sm:$0xff] %v417
        %426 = vst [vmem:[%s163 + $0x10] sm:$0xff] %v418
        %427 = vst [vmem:[%s163 + $0x18] sm:$0xff] %v419
        %428 = vst [vmem:[%s163 + $0x20] sm:$0xff] %v420
        %429 = vst [vmem:[%s163 + $0x28] sm:$0xff] %v421
        %430 = vst [vmem:[%s163 + $0x30] sm:$0xff] %v422
        %431 = vst [vmem:[%s163 + $0x38] sm:$0xff] %v423
        %s432 = sand.u32 %s93, 1
        %s433 = scalar_lea.sflag [#allocation3], %s432
        %s434 = sand.u32 %s93, 1
        %s435 = smul.addr %s434, 64
        %s436 = scalar_lea.vmem [#allocation2], %s435
        // Predicated region
        $region33: #{tpu_custom_call.1} parent=31 // pred_check
          %p437 = pneg %p103
        $region34: #{tpu_custom_call.1} parent=31 // pred_check_branch
          %439 = sbr.rel (%p437) target = $region36
        $region35: #{tpu_custom_call.1} parent=31 // pred_region
          %441 = vsyncadd %s433, 0
          %s442 = smul.addr %s17, 8
          %s443 = smul.addr %s442, 8
          %s444 = scalar_lea.hbm %s3, %s443
          %s445 = sshll.u32 %s436, 4
          %s446 = int_to_ptr.vmem [resolvable:$true] %s445
          %s447 = sshll.u32 %s444, 4
          %s448 = int_to_ptr.hbm [resolvable:$true] %s447
          %453 = dma.vmem_to_hbm [thread:$0]  %s446, 1024, %s448, %s433, 256, 256, 16
        $region36: #{tpu_custom_call.1} parent=31 // pred_fallthru
          _
      $region32: #{tpu_custom_call.1} parent=5 // pred_fallthru
        _
      %p454 = scmp.le.s32.totalorder 2, %s12
      // Predicated region
      $region37: #{tpu_custom_call.1} parent=5 // pred_check
        %p455 = pneg %p454
      $region38: #{tpu_custom_call.1} parent=5 // pred_check_branch
        %457 = sbr.rel (%p455) target = $region40
      $region39: #{tpu_custom_call.1} parent=5 // pred_region
        %s458 = ssub.s32 %s12, 2
        // Predicated region
        $region41: #{tpu_custom_call.1} parent=39 // pred_check
          %p459 = pneg %p109
        $region42: #{tpu_custom_call.1} parent=39 // pred_check_branch
          %461 = sbr.rel (%p459) target = $region44
        $region43: #{tpu_custom_call.1} parent=39 // pred_region
          %s462 = sand.u32 %s94, 1
          %s463 = scalar_lea.sflag [#allocation3], %s462
          %s464 = sand.u32 %s94, 1
          %s465 = smul.addr %s464, 64
          %s466 = scalar_lea.vmem [#allocation2], %s465
          %468 = dma.done %s463, 1024
        $region44: #{tpu_custom_call.1} parent=39 // pred_fallthru
          _
      $region40: #{tpu_custom_call.1} parent=5 // pred_fallthru
        _
    $region6: #{tpu_custom_call.1} parent=1 // loop_footer
      %s16 = sadd.s32 1, %s12
    $region7: #{tpu_custom_call.1} parent=1 // loop_footer_branch
      %11 = sbr.rel target = $region3
    $region8: #{tpu_custom_call.1} parent=1 // loop_exit
      _
    %469 = vsyncpa [#allocation3], 1
    %s470 = scalar_lea.sflag [#allocation3], 1
    %471 = vsyncpa %s470, 1

</llo_original>
